<compile_context>
chip_gen: v5e
topology: v5e:2x2
jax: 0.10.0
libtpu: 0.0.40
codegen_flags: <defaults>
</compile_context>

<pallas_src>
import jax
import jax.numpy as jnp
from jax.experimental import pallas as pl
from jax.experimental.pallas import tpu as pltpu

# ---- problem sizes / module config --------------------------------------------
B = 2              # batch
IN_DIM = 32        # in_dim
REP_DIM = 32       # representation_dim
EPS = 1e-5         # BatchNorm1d eps
SUB = 8            # f32 sublane quantum
BP = ((B + SUB - 1) // SUB) * SUB   # padded batch rows (-> 8)

# Config exercised: gating=True, pointwise=True, active='tanh', extra_layer=True
# TODO(synk): training-mode BatchNorm1d (batch statistics + running-stat update)
#             is not implemented; eval-mode (running stats) BN is used.


# ---- Pallas kernel: whole batch in one invocation ------------------------------
def gated_kernel(x_ref,
                 g1_ref, be1_ref, mu1_ref, var1_ref,     # bn (input BatchNorm1d)
                 w1_ref, b1_ref,                         # fc1
                 wi_ref, bi_ref,                         # inner Linear
                 g2_ref, be2_ref, mu2_ref, var2_ref,     # inner BatchNorm1d
                 w2_ref, b2_ref,                         # fc2 (pointwise gate)
                 o_ref):
    x = x_ref[...]                                                        # (BP, IN)

    # BatchNorm1d(in_dim), eval mode                            (VPU + EUP rsqrt)
    inv1 = jax.lax.rsqrt(var1_ref[...] + EPS)
    normed = (x - mu1_ref[...]) * (g1_ref[...] * inv1) + be1_ref[...]

    # fc1                                                        (MXU)
    rep = jnp.dot(normed, w1_ref[...], preferred_element_type=jnp.float32) + b1_ref[...]

    # inner: ReLU -> Linear -> BatchNorm1d (eval)                (VPU / MXU / VPU)
    h = jnp.maximum(rep, 0.0)
    h = jnp.dot(h, wi_ref[...], preferred_element_type=jnp.float32) + bi_ref[...]
    inv2 = jax.lax.rsqrt(var2_ref[...] + EPS)
    h = (h - mu2_ref[...]) * (g2_ref[...] * inv2) + be2_ref[...]

    # gating: tanh(fc2(normed)), pointwise                       (MXU + EUP tanh)
    gate = jnp.tanh(jnp.dot(normed, w2_ref[...], preferred_element_type=jnp.float32)
                    + b2_ref[...])

    # single lane-dense store of the whole (BP, REP_DIM) result
    o_ref[...] = (gate * h).astype(o_ref.dtype)


# ---- wrapper --------------------------------------------------------------------
def gated_forward(x, params):
    """x: (B, in_dim) or (B, 1, in_dim) — mirrors the PyTorch squeeze(1)."""
    if x.ndim == 3:
        x = x.reshape(x.shape[0], x.shape[-1])            # squeeze(1)
    b = x.shape[0]
    x_pad = jnp.pad(x, ((0, BP - b), (0, 0)))             # align sublanes (8 rows)

    row = lambda v: v.reshape(1, -1)
    args = (
        x_pad,
        row(params["bn1_gamma"]), row(params["bn1_beta"]),
        row(params["bn1_mean"]),  row(params["bn1_var"]),
        params["w1"], row(params["b1"]),
        params["wi"], row(params["bi"]),
        row(params["bn2_gamma"]), row(params["bn2_beta"]),
        row(params["bn2_mean"]),  row(params["bn2_var"]),
        params["w2"], row(params["b2"]),
    )

    def full_spec(a):
        nd = a.ndim
        return pl.BlockSpec(a.shape, lambda i, _nd=nd: (0,) * _nd)

    out = pl.pallas_call(
        gated_kernel,
        out_shape=jax.ShapeDtypeStruct((BP, REP_DIM), jnp.float32),
        grid_spec=pltpu.PrefetchScalarGridSpec(
            num_scalar_prefetch=0,
            grid=(1,),                                     # whole batch fused: one step
            in_specs=[full_spec(a) for a in args],
            out_specs=pl.BlockSpec((BP, REP_DIM), lambda i: (0, 0)),
        ),
        compiler_params=pltpu.CompilerParams(dimension_semantics=("arbitrary",)),
    )(*args)
    return out[:b]


# ---- pure-JAX reference (for correctness check) ----------------------------------
def reference_forward(x, p):
    if x.ndim == 3:
        x = x.reshape(x.shape[0], x.shape[-1])
    normed = (x - p["bn1_mean"]) / jnp.sqrt(p["bn1_var"] + EPS) * p["bn1_gamma"] + p["bn1_beta"]
    rep = normed @ p["w1"] + p["b1"]
    h = jnp.maximum(rep, 0.0) @ p["wi"] + p["bi"]
    h = (h - p["bn2_mean"]) / jnp.sqrt(p["bn2_var"] + EPS) * p["bn2_gamma"] + p["bn2_beta"]
    gate = jnp.tanh(normed @ p["w2"] + p["b2"])
    return gate * h


if __name__ == "__main__":
    key = jax.random.PRNGKey(0)
    ks = jax.random.split(key, 16)

    # deterministic synthetic inputs / parameters (weights stored (in, out), i.e. W.T)
    x = jax.random.normal(ks[0], (B, 1, IN_DIM), jnp.float32)   # exercises squeeze(1)
    params = {
        "bn1_gamma": jax.random.normal(ks[1], (IN_DIM,), jnp.float32) * 0.1 + 1.0,
        "bn1_beta":  jax.random.normal(ks[2], (IN_DIM,), jnp.float32) * 0.1,
        "bn1_mean":  jax.random.normal(ks[3], (IN_DIM,), jnp.float32) * 0.1,
        "bn1_var":   jax.random.uniform(ks[4], (IN_DIM,), jnp.float32, 0.5, 1.5),
        "w1": jax.random.normal(ks[5], (IN_DIM, REP_DIM), jnp.float32) * 0.1,
        "b1": jax.random.normal(ks[6], (REP_DIM,), jnp.float32) * 0.1,
        "wi": jax.random.normal(ks[7], (REP_DIM, REP_DIM), jnp.float32) * 0.1,
        "bi": jax.random.normal(ks[8], (REP_DIM,), jnp.float32) * 0.1,
        "bn2_gamma": jax.random.normal(ks[9],  (REP_DIM,), jnp.float32) * 0.1 + 1.0,
        "bn2_beta":  jax.random.normal(ks[10], (REP_DIM,), jnp.float32) * 0.1,
        "bn2_mean":  jax.random.normal(ks[11], (REP_DIM,), jnp.float32) * 0.1,
        "bn2_var":   jax.random.uniform(ks[12], (REP_DIM,), jnp.float32, 0.5, 1.5),
        "w2": jax.random.normal(ks[13], (IN_DIM, REP_DIM), jnp.float32) * 0.1,
        "b2": jax.random.normal(ks[14], (REP_DIM,), jnp.float32) * 0.1,
    }

    out = gated_forward(x, params)
    out = jax.block_until_ready(out)

    ref = reference_forward(x, params)
    assert out.shape == (B, REP_DIM), out.shape
    if not jnp.allclose(out, ref, atol=1e-4, rtol=1e-4):
        raise AssertionError(
            f"Pallas kernel mismatch vs reference: max abs err = {jnp.max(jnp.abs(out - ref))}")

    print("KERNEL_OK")
</pallas_src>

<mosaic_0001>
module attributes {stable_mosaic.version = 11 : i64} {
  func.func @gated_kernel(%arg0: i32, %arg1: memref<8x32xf32, #tpu.memory_space<vmem>>, %arg2: memref<1x32xf32, #tpu.memory_space<vmem>>, %arg3: memref<1x32xf32, #tpu.memory_space<vmem>>, %arg4: memref<1x32xf32, #tpu.memory_space<vmem>>, %arg5: memref<1x32xf32, #tpu.memory_space<vmem>>, %arg6: memref<32x32xf32, #tpu.memory_space<vmem>>, %arg7: memref<1x32xf32, #tpu.memory_space<vmem>>, %arg8: memref<32x32xf32, #tpu.memory_space<vmem>>, %arg9: memref<1x32xf32, #tpu.memory_space<vmem>>, %arg10: memref<1x32xf32, #tpu.memory_space<vmem>>, %arg11: memref<1x32xf32, #tpu.memory_space<vmem>>, %arg12: memref<1x32xf32, #tpu.memory_space<vmem>>, %arg13: memref<1x32xf32, #tpu.memory_space<vmem>>, %arg14: memref<32x32xf32, #tpu.memory_space<vmem>>, %arg15: memref<1x32xf32, #tpu.memory_space<vmem>>, %arg16: memref<8x32xf32, #tpu.memory_space<vmem>>) attributes {dimension_semantics = [#tpu.dimension_semantics<arbitrary>], iteration_bounds = array<i64: 1>, scalar_prefetch = 0 : i64, scratch_operands = 0 : i64, tpu.core_type = #tpu.core_type<tc>, window_params = [{pipeline_mode = #tpu.pipeline_mode<synchronous>, transform_indices = @transform_0, window_bounds = array<i64: 8, 32>}, {pipeline_mode = #tpu.pipeline_mode<synchronous>, transform_indices = @transform_1, window_bounds = array<i64: 1, 32>}, {pipeline_mode = #tpu.pipeline_mode<synchronous>, transform_indices = @transform_2, window_bounds = array<i64: 1, 32>}, {pipeline_mode = #tpu.pipeline_mode<synchronous>, transform_indices = @transform_3, window_bounds = array<i64: 1, 32>}, {pipeline_mode = #tpu.pipeline_mode<synchronous>, transform_indices = @transform_4, window_bounds = array<i64: 1, 32>}, {pipeline_mode = #tpu.pipeline_mode<synchronous>, transform_indices = @transform_5, window_bounds = array<i64: 32, 32>}, {pipeline_mode = #tpu.pipeline_mode<synchronous>, transform_indices = @transform_6, window_bounds = array<i64: 1, 32>}, {pipeline_mode = #tpu.pipeline_mode<synchronous>, transform_indices = @transform_7, window_bounds = array<i64: 32, 32>}, {pipeline_mode = #tpu.pipeline_mode<synchronous>, transform_indices = @transform_8, window_bounds = array<i64: 1, 32>}, {pipeline_mode = #tpu.pipeline_mode<synchronous>, transform_indices = @transform_9, window_bounds = array<i64: 1, 32>}, {pipeline_mode = #tpu.pipeline_mode<synchronous>, transform_indices = @transform_10, window_bounds = array<i64: 1, 32>}, {pipeline_mode = #tpu.pipeline_mode<synchronous>, transform_indices = @transform_11, window_bounds = array<i64: 1, 32>}, {pipeline_mode = #tpu.pipeline_mode<synchronous>, transform_indices = @transform_12, window_bounds = array<i64: 1, 32>}, {pipeline_mode = #tpu.pipeline_mode<synchronous>, transform_indices = @transform_13, window_bounds = array<i64: 32, 32>}, {pipeline_mode = #tpu.pipeline_mode<synchronous>, transform_indices = @transform_14, window_bounds = array<i64: 1, 32>}, {pipeline_mode = #tpu.pipeline_mode<synchronous>, transform_indices = @transform_15, window_bounds = array<i64: 8, 32>}]} {
    %c0 = arith.constant 0 : index
    %c0_0 = arith.constant 0 : index
    %0 = vector.load %arg1[%c0, %c0_0] : memref<8x32xf32, #tpu.memory_space<vmem>>, vector<8x32xf32>
    %c0_1 = arith.constant 0 : index
    %c0_2 = arith.constant 0 : index
    %1 = vector.load %arg5[%c0_1, %c0_2] : memref<1x32xf32, #tpu.memory_space<vmem>>, vector<1x32xf32>
    %cst = arith.constant 9.99999974E-6 : f32
    %2 = vector.broadcast %cst : f32 to vector<1x32xf32>
    %3 = arith.addf %1, %2 : vector<1x32xf32>
    %4 = math.rsqrt %3 : vector<1x32xf32>
    %c0_3 = arith.constant 0 : index
    %c0_4 = arith.constant 0 : index
    %5 = vector.load %arg4[%c0_3, %c0_4] : memref<1x32xf32, #tpu.memory_space<vmem>>, vector<1x32xf32>
    %6 = vector.broadcast %5 : vector<1x32xf32> to vector<8x32xf32>
    %7 = arith.subf %0, %6 : vector<8x32xf32>
    %c0_5 = arith.constant 0 : index
    %c0_6 = arith.constant 0 : index
    %8 = vector.load %arg2[%c0_5, %c0_6] : memref<1x32xf32, #tpu.memory_space<vmem>>, vector<1x32xf32>
    %9 = arith.mulf %8, %4 : vector<1x32xf32>
    %10 = vector.broadcast %9 : vector<1x32xf32> to vector<8x32xf32>
    %11 = arith.mulf %7, %10 : vector<8x32xf32>
    %c0_7 = arith.constant 0 : index
    %c0_8 = arith.constant 0 : index
    %12 = vector.load %arg3[%c0_7, %c0_8] : memref<1x32xf32, #tpu.memory_space<vmem>>, vector<1x32xf32>
    %13 = vector.broadcast %12 : vector<1x32xf32> to vector<8x32xf32>
    %14 = arith.addf %11, %13 : vector<8x32xf32>
    %c0_9 = arith.constant 0 : index
    %c0_10 = arith.constant 0 : index
    %15 = vector.load %arg6[%c0_9, %c0_10] : memref<32x32xf32, #tpu.memory_space<vmem>>, vector<32x32xf32>
    %cst_11 = arith.constant dense<0.000000e+00> : vector<8x32xf32>
    %16 = tpu.matmul %14, %15, %cst_11 {dimension_numbers = #tpu.dot_dimension_numbers<[1], [0], [0], [1], [0, 0, 1, 1], [], []>} : vector<8x32xf32>, vector<32x32xf32>, vector<8x32xf32> -> vector<8x32xf32>
    %c0_12 = arith.constant 0 : index
    %c0_13 = arith.constant 0 : index
    %17 = vector.load %arg7[%c0_12, %c0_13] : memref<1x32xf32, #tpu.memory_space<vmem>>, vector<1x32xf32>
    %18 = vector.broadcast %17 : vector<1x32xf32> to vector<8x32xf32>
    %19 = arith.addf %16, %18 : vector<8x32xf32>
    %cst_14 = arith.constant 0.000000e+00 : f32
    %20 = vector.broadcast %cst_14 : f32 to vector<8x32xf32>
    %21 = arith.maximumf %19, %20 : vector<8x32xf32>
    %c0_15 = arith.constant 0 : index
    %c0_16 = arith.constant 0 : index
    %22 = vector.load %arg8[%c0_15, %c0_16] : memref<32x32xf32, #tpu.memory_space<vmem>>, vector<32x32xf32>
    %cst_17 = arith.constant dense<0.000000e+00> : vector<8x32xf32>
    %23 = tpu.matmul %21, %22, %cst_17 {dimension_numbers = #tpu.dot_dimension_numbers<[1], [0], [0], [1], [0, 0, 1, 1], [], []>} : vector<8x32xf32>, vector<32x32xf32>, vector<8x32xf32> -> vector<8x32xf32>
    %c0_18 = arith.constant 0 : index
    %c0_19 = arith.constant 0 : index
    %24 = vector.load %arg9[%c0_18, %c0_19] : memref<1x32xf32, #tpu.memory_space<vmem>>, vector<1x32xf32>
    %25 = vector.broadcast %24 : vector<1x32xf32> to vector<8x32xf32>
    %26 = arith.addf %23, %25 : vector<8x32xf32>
    %c0_20 = arith.constant 0 : index
    %c0_21 = arith.constant 0 : index
    %27 = vector.load %arg13[%c0_20, %c0_21] : memref<1x32xf32, #tpu.memory_space<vmem>>, vector<1x32xf32>
    %cst_22 = arith.constant 9.99999974E-6 : f32
    %28 = vector.broadcast %cst_22 : f32 to vector<1x32xf32>
    %29 = arith.addf %27, %28 : vector<1x32xf32>
    %30 = math.rsqrt %29 : vector<1x32xf32>
    %c0_23 = arith.constant 0 : index
    %c0_24 = arith.constant 0 : index
    %31 = vector.load %arg12[%c0_23, %c0_24] : memref<1x32xf32, #tpu.memory_space<vmem>>, vector<1x32xf32>
    %32 = vector.broadcast %31 : vector<1x32xf32> to vector<8x32xf32>
    %33 = arith.subf %26, %32 : vector<8x32xf32>
    %c0_25 = arith.constant 0 : index
    %c0_26 = arith.constant 0 : index
    %34 = vector.load %arg10[%c0_25, %c0_26] : memref<1x32xf32, #tpu.memory_space<vmem>>, vector<1x32xf32>
    %35 = arith.mulf %34, %30 : vector<1x32xf32>
    %36 = vector.broadcast %35 : vector<1x32xf32> to vector<8x32xf32>
    %37 = arith.mulf %33, %36 : vector<8x32xf32>
    %c0_27 = arith.constant 0 : index
    %c0_28 = arith.constant 0 : index
    %38 = vector.load %arg11[%c0_27, %c0_28] : memref<1x32xf32, #tpu.memory_space<vmem>>, vector<1x32xf32>
    %39 = vector.broadcast %38 : vector<1x32xf32> to vector<8x32xf32>
    %40 = arith.addf %37, %39 : vector<8x32xf32>
    %c0_29 = arith.constant 0 : index
    %c0_30 = arith.constant 0 : index
    %41 = vector.load %arg14[%c0_29, %c0_30] : memref<32x32xf32, #tpu.memory_space<vmem>>, vector<32x32xf32>
    %cst_31 = arith.constant dense<0.000000e+00> : vector<8x32xf32>
    %42 = tpu.matmul %14, %41, %cst_31 {dimension_numbers = #tpu.dot_dimension_numbers<[1], [0], [0], [1], [0, 0, 1, 1], [], []>} : vector<8x32xf32>, vector<32x32xf32>, vector<8x32xf32> -> vector<8x32xf32>
    %c0_32 = arith.constant 0 : index
    %c0_33 = arith.constant 0 : index
    %43 = vector.load %arg15[%c0_32, %c0_33] : memref<1x32xf32, #tpu.memory_space<vmem>>, vector<1x32xf32>
    %44 = vector.broadcast %43 : vector<1x32xf32> to vector<8x32xf32>
    %45 = arith.addf %42, %44 : vector<8x32xf32>
    %46 = math.tanh %45 : vector<8x32xf32>
    %47 = arith.mulf %46, %40 : vector<8x32xf32>
    %c0_34 = arith.constant 0 : index
    %c0_35 = arith.constant 0 : index
    %48 = vector.load %arg16[%c0_34, %c0_35] : memref<8x32xf32, #tpu.memory_space<vmem>>, vector<8x32xf32>
    tpu.vector_store %arg16[%c0_34, %c0_35], %47 {strides = array<i32>} : memref<8x32xf32, #tpu.memory_space<vmem>>, vector<8x32xf32>,
    return
  }
  func.func @transform_0(%arg0: i32) -> (i32, i32) {
    %c0_i32 = arith.constant 0 : i32
    %c0_i32_0 = arith.constant 0 : i32
    %c0_i32_1 = arith.constant 0 : i32
    return %c0_i32, %c0_i32_0 : i32, i32
  }
  func.func @transform_1(%arg0: i32) -> (i32, i32) {
    %c0_i32 = arith.constant 0 : i32
    %c0_i32_0 = arith.constant 0 : i32
    %c0_i32_1 = arith.constant 0 : i32
    return %c0_i32, %c0_i32_0 : i32, i32
  }
  func.func @transform_2(%arg0: i32) -> (i32, i32) {
    %c0_i32 = arith.constant 0 : i32
    %c0_i32_0 = arith.constant 0 : i32
    %c0_i32_1 = arith.constant 0 : i32
    return %c0_i32, %c0_i32_0 : i32, i32
  }
  func.func @transform_3(%arg0: i32) -> (i32, i32) {
    %c0_i32 = arith.constant 0 : i32
    %c0_i32_0 = arith.constant 0 : i32
    %c0_i32_1 = arith.constant 0 : i32
    return %c0_i32, %c0_i32_0 : i32, i32
  }
  func.func @transform_4(%arg0: i32) -> (i32, i32) {
    %c0_i32 = arith.constant 0 : i32
    %c0_i32_0 = arith.constant 0 : i32
    %c0_i32_1 = arith.constant 0 : i32
    return %c0_i32, %c0_i32_0 : i32, i32
  }
  func.func @transform_5(%arg0: i32) -> (i32, i32) {
    %c0_i32 = arith.constant 0 : i32
    %c0_i32_0 = arith.constant 0 : i32
    %c0_i32_1 = arith.constant 0 : i32
    return %c0_i32, %c0_i32_0 : i32, i32
  }
  func.func @transform_6(%arg0: i32) -> (i32, i32) {
    %c0_i32 = arith.constant 0 : i32
    %c0_i32_0 = arith.constant 0 : i32
    %c0_i32_1 = arith.constant 0 : i32
    return %c0_i32, %c0_i32_0 : i32, i32
  }
  func.func @transform_7(%arg0: i32) -> (i32, i32) {
    %c0_i32 = arith.constant 0 : i32
    %c0_i32_0 = arith.constant 0 : i32
    %c0_i32_1 = arith.constant 0 : i32
    return %c0_i32, %c0_i32_0 : i32, i32
  }
  func.func @transform_8(%arg0: i32) -> (i32, i32) {
    %c0_i32 = arith.constant 0 : i32
    %c0_i32_0 = arith.constant 0 : i32
    %c0_i32_1 = arith.constant 0 : i32
    return %c0_i32, %c0_i32_0 : i32, i32
  }
  func.func @transform_9(%arg0: i32) -> (i32, i32) {
    %c0_i32 = arith.constant 0 : i32
    %c0_i32_0 = arith.constant 0 : i32
    %c0_i32_1 = arith.constant 0 : i32
    return %c0_i32, %c0_i32_0 : i32, i32
  }
  func.func @transform_10(%arg0: i32) -> (i32, i32) {
    %c0_i32 = arith.constant 0 : i32
    %c0_i32_0 = arith.constant 0 : i32
    %c0_i32_1 = arith.constant 0 : i32
    return %c0_i32, %c0_i32_0 : i32, i32
  }
  func.func @transform_11(%arg0: i32) -> (i32, i32) {
    %c0_i32 = arith.constant 0 : i32
    %c0_i32_0 = arith.constant 0 : i32
    %c0_i32_1 = arith.constant 0 : i32
    return %c0_i32, %c0_i32_0 : i32, i32
  }
  func.func @transform_12(%arg0: i32) -> (i32, i32) {
    %c0_i32 = arith.constant 0 : i32
    %c0_i32_0 = arith.constant 0 : i32
    %c0_i32_1 = arith.constant 0 : i32
    return %c0_i32, %c0_i32_0 : i32, i32
  }
  func.func @transform_13(%arg0: i32) -> (i32, i32) {
    %c0_i32 = arith.constant 0 : i32
    %c0_i32_0 = arith.constant 0 : i32
    %c0_i32_1 = arith.constant 0 : i32
    return %c0_i32, %c0_i32_0 : i32, i32
  }
  func.func @transform_14(%arg0: i32) -> (i32, i32) {
    %c0_i32 = arith.constant 0 : i32
    %c0_i32_0 = arith.constant 0 : i32
    %c0_i32_1 = arith.constant 0 : i32
    return %c0_i32, %c0_i32_0 : i32, i32
  }
  func.func @transform_15(%arg0: i32) -> (i32, i32) {
    %c0_i32 = arith.constant 0 : i32
    %c0_i32_0 = arith.constant 0 : i32
    %c0_i32_1 = arith.constant 0 : i32
    return %c0_i32, %c0_i32_0 : i32, i32
  }
}

</mosaic_0001>

<llo_original>
// kernel: tpu_custom_call.1
$region0: #{tpu_custom_call.1}
  #allocation0 [shape = 'u32[]', space=smem, size = 0x4, offset = 0x4, fixed_abs, tag = 'smem constant byte address 0x4 - core index']
  #allocation1 [shape = 'u32[72,128]{1,0:T(1,128)}', space=vmem, size = 0x9000, scoped, tag = 'internal scratch']
  %s0 = inlined_call_operand.hbm [shape: f32[8,32], index: 0, kind: input, shape index: {}]
  %s1 = inlined_call_operand.hbm [shape: f32[1,32], index: 1, kind: input, shape index: {}]
  %s2 = inlined_call_operand.vmem [shape: f32[1,32], index: 2, kind: input, shape index: {}]
  %s3 = inlined_call_operand.vmem [shape: f32[1,32], index: 3, kind: input, shape index: {}]
  %s4 = inlined_call_operand.vmem [shape: f32[1,32], index: 4, kind: input, shape index: {}]
  %s5 = inlined_call_operand.hbm [shape: f32[32,32], index: 5, kind: input, shape index: {}]
  %s6 = inlined_call_operand.vmem [shape: f32[1,32], index: 6, kind: input, shape index: {}]
  %s7 = inlined_call_operand.hbm [shape: f32[32,32], index: 7, kind: input, shape index: {}]
  %s8 = inlined_call_operand.vmem [shape: f32[1,32], index: 8, kind: input, shape index: {}]
  %s9 = inlined_call_operand.vmem [shape: f32[1,32], index: 9, kind: input, shape index: {}]
  %s10 = inlined_call_operand.vmem [shape: f32[1,32], index: 10, kind: input, shape index: {}]
  %s11 = inlined_call_operand.vmem [shape: f32[1,32], index: 11, kind: input, shape index: {}]
  %s12 = inlined_call_operand.vmem [shape: f32[1,32], index: 12, kind: input, shape index: {}]
  %s13 = inlined_call_operand.hbm [shape: f32[32,32], index: 13, kind: input, shape index: {}]
  %s14 = inlined_call_operand.vmem [shape: f32[1,32], index: 14, kind: input, shape index: {}]
  %s15 = inlined_call_operand.hbm [shape: f32[8,32], index: 15, kind: output, shape index: {}]
  %s16 = sld [smem:[#allocation0]]
  $region90: #{tpu_custom_call.1} parent=0
    _
  %s18 = ssub.s32 1, %s16
  %s19 = scalar_select 0, %s18, %s16
  $region1: #{tpu_custom_call.1} parent=0
    #allocation2 [shape = 'u8[4096]{0}', space=vmem, size = 0x1000, scoped, tag = 'input window, operand 0, single buffered']
    #allocation3 [shape = 's32[1]{0}', space=sflag, size = 0x4, scoped, tag = 'scoped memory for tpu_custom_call.1']
    #allocation4 [shape = 's32[1]{0}', space=sflag, size = 0x4, scoped, tag = 'scoped memory for tpu_custom_call.1']
    #allocation5 [shape = 'u8[512]{0}', space=vmem, size = 0x400, scoped, tag = 'input window, operand 1, single buffered']
    #allocation6 [shape = 's32[1]{0}', space=sflag, size = 0x4, scoped, tag = 'scoped memory for tpu_custom_call.1']
    #allocation7 [shape = 'u8[16384]{0}', space=vmem, size = 0x4000, scoped, tag = 'input window, operand 5, single buffered']
    #allocation8 [shape = 'u8[16384]{0}', space=vmem, size = 0x4000, scoped, tag = 'input window, operand 7, single buffered']
    #allocation9 [shape = 's32[1]{0}', space=sflag, size = 0x4, scoped, tag = 'scoped memory for tpu_custom_call.1']
    #allocation10 [shape = 'u8[16384]{0}', space=vmem, size = 0x4000, scoped, tag = 'input window, operand 13, single buffered']
    #allocation11 [shape = 'u8[4096]{0}', space=vmem, size = 0x1000, scoped, tag = 'output window, operand 0, single buffered']
    %20 = vsyncpa [#allocation3], 0
    %21 = vsyncpa [#allocation6], 0
    %22 = vsyncpa [#allocation9], 0
    %23 = vsyncpa [#allocation4], 0
    // Predicated region
    $region2: #{tpu_custom_call.1} parent=1 // pred_check
      _
    $region3: #{tpu_custom_call.1} parent=1 // pred_check_branch
      %25 = sbr.rel (0) target = $region5
    $region4: #{tpu_custom_call.1} parent=1 // pred_region
      %27 = vsyncadd [#allocation3], 0
      %s29 = sshll.u32 %s0, 4
      %s30 = int_to_ptr.hbm [resolvable:$true] %s29
      %s31 = sshll.u32 [#allocation2], 4
      %s32 = int_to_ptr.vmem [resolvable:$true] %s31
      %34 = dma.hbm_to_vmem [thread:$0]  %s30, 128, %s32, [#allocation3]
    $region5: #{tpu_custom_call.1} parent=1 // pred_fallthru
      _
    // Predicated region
    $region6: #{tpu_custom_call.1} parent=1 // pred_check
      _
    $region7: #{tpu_custom_call.1} parent=1 // pred_check_branch
      %36 = sbr.rel (0) target = $region9
    $region8: #{tpu_custom_call.1} parent=1 // pred_region
      %38 = vsyncadd [#allocation6], 0
      %s40 = sshll.u32 %s1, 4
      %s41 = int_to_ptr.hbm [resolvable:$true] %s40
      %s42 = sshll.u32 [#allocation5], 4
      %s43 = int_to_ptr.vmem [resolvable:$true] %s42
      %45 = dma.hbm_to_vmem [thread:$0]  %s41, 16, %s43, [#allocation6]
    $region9: #{tpu_custom_call.1} parent=1 // pred_fallthru
      _
    // Predicated region
    $region10: #{tpu_custom_call.1} parent=1 // pred_check
      _
    $region11: #{tpu_custom_call.1} parent=1 // pred_check_branch
      %47 = sbr.rel (0) target = $region13
    $region12: #{tpu_custom_call.1} parent=1 // pred_region
      _
    $region13: #{tpu_custom_call.1} parent=1 // pred_fallthru
      _
    // Predicated region
    $region14: #{tpu_custom_call.1} parent=1 // pred_check
      _
    $region15: #{tpu_custom_call.1} parent=1 // pred_check_branch
      %49 = sbr.rel (0) target = $region17
    $region16: #{tpu_custom_call.1} parent=1 // pred_region
      _
    $region17: #{tpu_custom_call.1} parent=1 // pred_fallthru
      _
    // Predicated region
    $region18: #{tpu_custom_call.1} parent=1 // pred_check
      _
    $region19: #{tpu_custom_call.1} parent=1 // pred_check_branch
      %51 = sbr.rel (0) target = $region21
    $region20: #{tpu_custom_call.1} parent=1 // pred_region
      _
    $region21: #{tpu_custom_call.1} parent=1 // pred_fallthru
      _
    // Predicated region
    $region22: #{tpu_custom_call.1} parent=1 // pred_check
      _
    $region23: #{tpu_custom_call.1} parent=1 // pred_check_branch
      %53 = sbr.rel (0) target = $region25
    $region24: #{tpu_custom_call.1} parent=1 // pred_region
      %55 = vsyncadd [#allocation6], 0
      %s56 = sshll.u32 %s5, 4
      %s57 = int_to_ptr.hbm [resolvable:$true] %s56
      %s58 = sshll.u32 [#allocation7], 4
      %s59 = int_to_ptr.vmem [resolvable:$true] %s58
      %64 = dma.hbm_to_vmem [thread:$0]  %s57, 512, %s59, [#allocation6], 128, 128, 8
    $region25: #{tpu_custom_call.1} parent=1 // pred_fallthru
      _
    // Predicated region
    $region26: #{tpu_custom_call.1} parent=1 // pred_check
      _
    $region27: #{tpu_custom_call.1} parent=1 // pred_check_branch
      %66 = sbr.rel (0) target = $region29
    $region28: #{tpu_custom_call.1} parent=1 // pred_region
      _
    $region29: #{tpu_custom_call.1} parent=1 // pred_fallthru
      _
    // Predicated region
    $region30: #{tpu_custom_call.1} parent=1 // pred_check
      _
    $region31: #{tpu_custom_call.1} parent=1 // pred_check_branch
      %68 = sbr.rel (0) target = $region33
    $region32: #{tpu_custom_call.1} parent=1 // pred_region
      %70 = vsyncadd [#allocation9], 0
      %s71 = sshll.u32 %s7, 4
      %s72 = int_to_ptr.hbm [resolvable:$true] %s71
      %s73 = sshll.u32 [#allocation8], 4
      %s74 = int_to_ptr.vmem [resolvable:$true] %s73
      %79 = dma.hbm_to_vmem [thread:$0]  %s72, 512, %s74, [#allocation9], 128, 128, 8
    $region33: #{tpu_custom_call.1} parent=1 // pred_fallthru
      _
    // Predicated region
    $region34: #{tpu_custom_call.1} parent=1 // pred_check
      _
    $region35: #{tpu_custom_call.1} parent=1 // pred_check_branch
      %81 = sbr.rel (0) target = $region37
    $region36: #{tpu_custom_call.1} parent=1 // pred_region
      _
    $region37: #{tpu_custom_call.1} parent=1 // pred_fallthru
      _
    // Predicated region
    $region38: #{tpu_custom_call.1} parent=1 // pred_check
      _
    $region39: #{tpu_custom_call.1} parent=1 // pred_check_branch
      %83 = sbr.rel (0) target = $region41
    $region40: #{tpu_custom_call.1} parent=1 // pred_region
      _
    $region41: #{tpu_custom_call.1} parent=1 // pred_fallthru
      _
    // Predicated region
    $region42: #{tpu_custom_call.1} parent=1 // pred_check
      _
    $region43: #{tpu_custom_call.1} parent=1 // pred_check_branch
      %85 = sbr.rel (0) target = $region45
    $region44: #{tpu_custom_call.1} parent=1 // pred_region
      _
    $region45: #{tpu_custom_call.1} parent=1 // pred_fallthru
      _
    // Predicated region
    $region46: #{tpu_custom_call.1} parent=1 // pred_check
      _
    $region47: #{tpu_custom_call.1} parent=1 // pred_check_branch
      %87 = sbr.rel (0) target = $region49
    $region48: #{tpu_custom_call.1} parent=1 // pred_region
      _
    $region49: #{tpu_custom_call.1} parent=1 // pred_fallthru
      _
    // Predicated region
    $region50: #{tpu_custom_call.1} parent=1 // pred_check
      _
    $region51: #{tpu_custom_call.1} parent=1 // pred_check_branch
      %89 = sbr.rel (0) target = $region53
    $region52: #{tpu_custom_call.1} parent=1 // pred_region
      _
    $region53: #{tpu_custom_call.1} parent=1 // pred_fallthru
      _
    // Predicated region
    $region54: #{tpu_custom_call.1} parent=1 // pred_check
      _
    $region55: #{tpu_custom_call.1} parent=1 // pred_check_branch
      %91 = sbr.rel (0) target = $region57
    $region56: #{tpu_custom_call.1} parent=1 // pred_region
      %93 = vsyncadd [#allocation9], 0
      %s94 = sshll.u32 %s13, 4
      %s95 = int_to_ptr.hbm [resolvable:$true] %s94
      %s96 = sshll.u32 [#allocation10], 4
      %s97 = int_to_ptr.vmem [resolvable:$true] %s96
      %102 = dma.hbm_to_vmem [thread:$0]  %s95, 512, %s97, [#allocation9], 128, 128, 8
    $region57: #{tpu_custom_call.1} parent=1 // pred_fallthru
      _
    // Predicated region
    $region58: #{tpu_custom_call.1} parent=1 // pred_check
      _
    $region59: #{tpu_custom_call.1} parent=1 // pred_check_branch
      %104 = sbr.rel (0) target = $region61
    $region60: #{tpu_custom_call.1} parent=1 // pred_region
      _
    $region61: #{tpu_custom_call.1} parent=1 // pred_fallthru
      _
    // Predicated region
    $region62: #{tpu_custom_call.1} parent=1 // pred_check
      _
    $region63: #{tpu_custom_call.1} parent=1 // pred_check_branch
      %106 = sbr.rel (0) target = $region65
    $region64: #{tpu_custom_call.1} parent=1 // pred_region
      %108 = dma.done [#allocation3], 128
    $region65: #{tpu_custom_call.1} parent=1 // pred_fallthru
      _
    // Predicated region
    $region66: #{tpu_custom_call.1} parent=1 // pred_check
      _
    $region67: #{tpu_custom_call.1} parent=1 // pred_check_branch
      %110 = sbr.rel (0) target = $region69
    $region68: #{tpu_custom_call.1} parent=1 // pred_region
      %112 = dma.done [#allocation6], 16
    $region69: #{tpu_custom_call.1} parent=1 // pred_fallthru
      _
    // Predicated region
    $region70: #{tpu_custom_call.1} parent=1 // pred_check
      _
    $region71: #{tpu_custom_call.1} parent=1 // pred_check_branch
      %114 = sbr.rel (0) target = $region73
    $region72: #{tpu_custom_call.1} parent=1 // pred_region
      %116 = dma.done [#allocation6], 512
    $region73: #{tpu_custom_call.1} parent=1 // pred_fallthru
      _
    // Predicated region
    $region74: #{tpu_custom_call.1} parent=1 // pred_check
      _
    $region75: #{tpu_custom_call.1} parent=1 // pred_check_branch
      %118 = sbr.rel (0) target = $region77
    $region76: #{tpu_custom_call.1} parent=1 // pred_region
      %120 = dma.done [#allocation9], 512
    $region77: #{tpu_custom_call.1} parent=1 // pred_fallthru
      _
    // Predicated region
    $region78: #{tpu_custom_call.1} parent=1 // pred_check
      _
    $region79: #{tpu_custom_call.1} parent=1 // pred_check_branch
      %122 = sbr.rel (0) target = $region81
    $region80: #{tpu_custom_call.1} parent=1 // pred_region
      %124 = dma.done [#allocation9], 512
    $region81: #{tpu_custom_call.1} parent=1 // pred_fallthru
      _
    %v125 = vld [vmem:[#allocation2] sm:$0xff]
    %v126 = vld [vmem:[%s4] sm:$0x1]
    %v127 = vadd.f32 %v126, 1e-05
    %v128 = vrsqrt.pop %v127
    %v129 = vmul.f32 %v128, %v127
    %v130 = vmul.f32 %v129, %v128
    %v131 = vmul.f32 0.5, %v130
    %v132 = vsub.f32 1.5, %v131
    %v133 = vmul.f32 %v128, %v132
    %vm134 = vweird.f32 %v127
    %vm135 = vweird.f32 %v128
    %vm136 = vmor %vm134, %vm135
    %v137 = vsel %vm136, %v128, %v133
    %v138 = vld [vmem:[%s3] sm:$0x1]
    %v140 = vperm.slane %v138, 0
    %v142 = vsub.f32 %v125, %v140
    %v143 = vld [vmem:[#allocation5] sm:$0x1]
    %v144 = vmul.f32 %v143, %v137
    %v146 = vperm.slane %v144, 0
    %v148 = vmul.f32 %v142, %v146
    %v149 = vld [vmem:[%s2] sm:$0x1]
    %v151 = vperm.slane %v149, 0
    %v153 = vadd.f32 %v148, %v151
    %v154 = vld [vmem:[#allocation7] sm:$0xff]
    %v155 = vld [vmem:[#allocation7 + $0x8] sm:$0xff]
    %v156 = vld [vmem:[#allocation7 + $0x10] sm:$0xff]
    %v157 = vld [vmem:[#allocation7 + $0x18] sm:$0xff]
    %v158 = vld [vmem:[%s6] sm:$0x1]
    %v160 = vperm.slane %v158, 0
    %vm162 = vcmask 261120
    %v164 = vsel %vm162, %v153, 0
    %166 = vmatpush.msra.mxu0 0.0
    %167 = vmatpush.msra.mxu0 0.0
    %168 = vmatpush.msra.mxu0 0.0
    %169 = vmatpush.msra.mxu0 0.0
    %170 = vmatpush.msra.mxu0 0.0
    %171 = vmatpush.msra.mxu0 0.0
    %172 = vmatpush.msra.mxu0 0.0
    %173 = vmatpush.msra.mxu0 0.0
    %174 = vmatpush.msra.mxu0 0.0
    %175 = vmatpush.msra.mxu0 0.0
    %176 = vmatpush.msra.mxu0 0.0
    %177 = vmatpush.msra.mxu0 0.0
    %178 = vmatpush.msra.mxu0 %v157
    %179 = vmatpush.msra.mxu0 %v156
    %180 = vmatpush.msra.mxu0 %v155
    %181 = vmatpush.msra.mxu0 %v154
    %182 = vmatmul.f32.gmra.mxu0 %v164
    %v183 = vpop.f32.mrf.mxu0
    %v184 = vadd.f32 %v160, %v183
    %185 = vdwg.mxu0
    %v186 = vmax.f32 %v184, 0.0
    %v187 = vld [vmem:[#allocation8] sm:$0xff]
    %v188 = vld [vmem:[#allocation8 + $0x8] sm:$0xff]
    %v189 = vld [vmem:[#allocation8 + $0x10] sm:$0xff]
    %v190 = vld [vmem:[#allocation8 + $0x18] sm:$0xff]
    %v191 = vld [vmem:[%s8] sm:$0x1]
    %v193 = vperm.slane %v191, 0
    %v196 = vsel %vm162, %v186, 0
    %198 = vmatpush.msra.mxu0 0.0
    %199 = vmatpush.msra.mxu0 0.0
    %200 = vmatpush.msra.mxu0 0.0
    %201 = vmatpush.msra.mxu0 0.0
    %202 = vmatpush.msra.mxu0 0.0
    %203 = vmatpush.msra.mxu0 0.0
    %204 = vmatpush.msra.mxu0 0.0
    %205 = vmatpush.msra.mxu0 0.0
    %206 = vmatpush.msra.mxu0 0.0
    %207 = vmatpush.msra.mxu0 0.0
    %208 = vmatpush.msra.mxu0 0.0
    %209 = vmatpush.msra.mxu0 0.0
    %210 = vmatpush.msra.mxu0 %v190
    %211 = vmatpush.msra.mxu0 %v189
    %212 = vmatpush.msra.mxu0 %v188
    %213 = vmatpush.msra.mxu0 %v187
    %214 = vmatmul.f32.gmra.mxu0 %v196
    %v215 = vpop.f32.mrf.mxu0
    %v216 = vadd.f32 %v193, %v215
    %217 = vdwg.mxu0
    %v218 = vld [vmem:[%s12] sm:$0x1]
    %v219 = vadd.f32 %v218, 1e-05
    %v220 = vrsqrt.pop %v219
    %v221 = vmul.f32 %v220, %v219
    %v222 = vmul.f32 %v221, %v220
    %v223 = vmul.f32 0.5, %v222
    %v224 = vsub.f32 1.5, %v223
    %v225 = vmul.f32 %v220, %v224
    %vm226 = vweird.f32 %v219
    %vm227 = vweird.f32 %v220
    %vm228 = vmor %vm226, %vm227
    %v229 = vsel %vm228, %v220, %v225
    %v230 = vld [vmem:[%s11] sm:$0x1]
    %v232 = vperm.slane %v230, 0
    %v234 = vsub.f32 %v216, %v232
    %v235 = vld [vmem:[%s9] sm:$0x1]
    %v236 = vmul.f32 %v235, %v229
    %v238 = vperm.slane %v236, 0
    %v240 = vmul.f32 %v234, %v238
    %v241 = vld [vmem:[%s10] sm:$0x1]
    %v243 = vperm.slane %v241, 0
    %v245 = vadd.f32 %v240, %v243
    %v246 = vld [vmem:[#allocation10] sm:$0xff]
    %v247 = vld [vmem:[#allocation10 + $0x8] sm:$0xff]
    %v248 = vld [vmem:[#allocation10 + $0x10] sm:$0xff]
    %v249 = vld [vmem:[#allocation10 + $0x18] sm:$0xff]
    %v250 = vld [vmem:[%s14] sm:$0x1]
    %v252 = vperm.slane %v250, 0
    %254 = vmatpush.msra.mxu0 0.0
    %255 = vmatpush.msra.mxu0 0.0
    %256 = vmatpush.msra.mxu0 0.0
    %257 = vmatpush.msra.mxu0 0.0
    %258 = vmatpush.msra.mxu0 0.0
    %259 = vmatpush.msra.mxu0 0.0
    %260 = vmatpush.msra.mxu0 0.0
    %261 = vmatpush.msra.mxu0 0.0
    %262 = vmatpush.msra.mxu0 0.0
    %263 = vmatpush.msra.mxu0 0.0
    %264 = vmatpush.msra.mxu0 0.0
    %265 = vmatpush.msra.mxu0 0.0
    %266 = vmatpush.msra.mxu0 %v249
    %267 = vmatpush.msra.mxu0 %v248
    %268 = vmatpush.msra.mxu0 %v247
    %269 = vmatpush.msra.mxu0 %v246
    %270 = vmatmul.f32.gmra.mxu0 %v164
    %v271 = vpop.f32.mrf.mxu0
    %v272 = vadd.f32 %v252, %v271
    %273 = vdwg.mxu0
    %v274 = vtanh.pop %v272
    %v275 = vmul.f32 %v274, %v245
    %276 = vst.msk [vmem:[#allocation11] sm:$0xff] %vm162, %v275
    // Predicated region
    $region82: #{tpu_custom_call.1} parent=1 // pred_check
      _
    $region83: #{tpu_custom_call.1} parent=1 // pred_check_branch
      %278 = sbr.rel (0) target = $region85
    $region84: #{tpu_custom_call.1} parent=1 // pred_region
      %280 = vsyncadd [#allocation4], 0
      %s282 = sshll.u32 [#allocation11], 4
      %s283 = int_to_ptr.vmem [resolvable:$true] %s282
      %s284 = sshll.u32 %s15, 4
      %s285 = int_to_ptr.hbm [resolvable:$true] %s284
      %287 = dma.vmem_to_hbm [thread:$0]  %s283, 128, %s285, [#allocation4]
    $region85: #{tpu_custom_call.1} parent=1 // pred_fallthru
      _
    // Predicated region
    $region86: #{tpu_custom_call.1} parent=1 // pred_check
      _
    $region87: #{tpu_custom_call.1} parent=1 // pred_check_branch
      %289 = sbr.rel (0) target = $region89
    $region88: #{tpu_custom_call.1} parent=1 // pred_region
      %291 = dma.done [#allocation4], 128
    $region89: #{tpu_custom_call.1} parent=1 // pred_fallthru
      _
    %292 = vsyncpa [#allocation3], 1
    %293 = vsyncpa [#allocation6], 1
    %294 = vsyncpa [#allocation9], 1
    %295 = vsyncpa [#allocation4], 1

</llo_original>
